<compile_context>
chip_gen: v7x
topology: tpu7x:2x2x1
jax: 0.10.0
libtpu: 0.0.40
codegen_flags: <defaults>
</compile_context>

<pallas_src>
import jax
import jax.numpy as jnp
from jax.experimental import pallas as pl
from jax.experimental.pallas import tpu as pltpu

_MIB = 1024 * 1024
_LANE_CANDIDATES = (4096, 2048, 1024, 512, 256, 128)


# -----------------------------------------------------------------------------
# Kernels
# -----------------------------------------------------------------------------
def _dma_copy_kernel(x_hbm_ref, o_hbm_ref, sem):
    # One HBM -> HBM DMA for the whole buffer; no VMEM round trip.
    cp = pltpu.make_async_copy(x_hbm_ref, o_hbm_ref, sem)
    cp.start()
    cp.wait()


def _copy_kernel(x_ref, o_ref):
    # Elementwise pass-through on the current VMEM tile (fallback path).
    o_ref[...] = x_ref[...]


# -----------------------------------------------------------------------------
# Materializing copy: single-DMA primary, tiled fallback
# -----------------------------------------------------------------------------
def _identity_copy_dma(x: jax.Array) -> jax.Array:
    """Identity materialized via one HBM->HBM DMA (no VMEM transit)."""
    nbytes = int(x.size) * jnp.dtype(x.dtype).itemsize
    return pl.pallas_call(
        _dma_copy_kernel,
        out_shape=jax.ShapeDtypeStruct(x.shape, x.dtype),
        in_specs=[pl.BlockSpec(memory_space=pl.ANY)],
        out_specs=pl.BlockSpec(memory_space=pl.ANY),
        scratch_shapes=[pltpu.SemaphoreType.DMA(())],
        cost_estimate=pl.CostEstimate(
            flops=0, transcendentals=0, bytes_accessed=2 * nbytes),
    )(x)


def _copy_budget():
    """Generation-aware (block_bytes, vmem_limit_bytes) for the tiled copy."""
    try:
        vmem_cap = int(pltpu.get_tpu_info().vmem_capacity_bytes)
    except Exception:  # no TPU attached / interpret mode: conservative default
        return 4 * _MIB, None
    if vmem_cap <= 64 * _MIB:
        # v7x-class: 64 MiB physical VMEM per TensorCore.
        # 4 live buffers (double-buffered in+out) x 6 MiB = 24 MiB < 40 MiB limit.
        return 6 * _MIB, 40 * _MIB
    # v5e / v6e-class: 128 MiB physical VMEM.  Raise the scoped limit explicitly
    # so 8 MiB blocks are safe even under v5e's 16 MiB scoped default.
    return 8 * _MIB, 48 * _MIB


def _identity_copy_tiled(x: jax.Array) -> jax.Array:
    """Identity via a lane-dense, byte-budgeted tiled copy (fallback path)."""
    orig_shape = x.shape
    size = int(x.size)
    itemsize = jnp.dtype(x.dtype).itemsize

    # Lane-dense flatten: last dim must be a large multiple of 128.
    lane = next((c for c in _LANE_CANDIDATES if size % c == 0), None)
    padded = False
    if lane is None:
        # Pad the flattened buffer to a full 1024-lane width instead of
        # degrading to masked stores or a single oversized block.
        lane = 1024
        pad = (-size) % lane
        flat = jnp.pad(x.reshape(-1), (0, pad))
        rows = (size + pad) // lane
        x2d = flat.reshape(rows, lane)
        padded = True
    else:
        rows = size // lane
        x2d = x.reshape(rows, lane)

    block_bytes, vmem_limit = _copy_budget()
    sublane = {4: 8, 2: 16, 1: 32}.get(itemsize, 8)
    row_bytes = max(lane * itemsize, 1)

    if rows <= sublane:
        tile_rows = rows  # full extent of the row axis is always legal
    else:
        tile_rows = max((block_bytes // row_bytes) // sublane * sublane, sublane)
        if rows >= 2 * sublane:
            # Keep >= 2 grid steps so v7x's 2 TensorCores both stream the copy.
            half_rows = pl.cdiv(pl.cdiv(rows, 2), sublane) * sublane
            tile_rows = min(tile_rows, half_rows)
        tile_rows = min(tile_rows, rows)

    grid = (pl.cdiv(rows, tile_rows),)

    cp_kwargs = dict(dimension_semantics=("parallel",))
    if vmem_limit is not None:
        cp_kwargs["vmem_limit_bytes"] = int(vmem_limit)

    out = pl.pallas_call(
        _copy_kernel,
        out_shape=jax.ShapeDtypeStruct((rows, lane), x.dtype),
        grid=grid,
        in_specs=[pl.BlockSpec((tile_rows, lane), lambda i: (i, 0))],
        out_specs=pl.BlockSpec((tile_rows, lane), lambda i: (i, 0)),
        compiler_params=pltpu.CompilerParams(**cp_kwargs),
        cost_estimate=pl.CostEstimate(
            flops=0, transcendentals=0, bytes_accessed=2 * rows * lane * itemsize),
    )(x2d)

    if padded:
        return out.reshape(-1)[:size].reshape(orig_shape)
    return out.reshape(orig_shape)


def _identity_copy(x: jax.Array) -> jax.Array:
    try:
        return _identity_copy_dma(x)
    except Exception:
        # Execution paths without manual-DMA discharge support (e.g. the HLO
        # interpreter used when no physical TPU is attached) fall back to the
        # blocked lane-dense copy, which lowers everywhere.
        return _identity_copy_tiled(x)


# -----------------------------------------------------------------------------
# Forward
# -----------------------------------------------------------------------------
def pytorch_layer_forward(x: jax.Array, inference: bool = False,
                          materialize: bool = False) -> jax.Array:
    """Pallas implementation of PyTorchLayer.forward (identity pass-through)."""
    del inference  # no behavioural difference for an identity forward
    if not materialize:
        # True no-op: no parameters, no compute -> returning x is genuinely
        # free on every TPU generation (no hidden defensive HBM copy, no
        # kernel-launch overhead).
        return x
    if x.size == 0:
        return x  # nothing to launch for zero-extent inputs
    return _identity_copy(x)


if __name__ == "__main__":
    key = jax.random.PRNGKey(0)
    # Small NCHW-style input consistent with a conv-style layer interface.
    x = jax.random.normal(key, (2, 4, 16, 16), dtype=jnp.float32)

    # Default (zero-cost) path.
    y = pytorch_layer_forward(x, inference=True)
    y = jax.block_until_ready(y)
    assert y.shape == x.shape and y.dtype == x.dtype
    assert bool(jnp.array_equal(y, x))

    # Materializing path (single HBM->HBM DMA; tiled-copy fallback).
    y2 = pytorch_layer_forward(x, inference=True, materialize=True)
    y2 = jax.block_until_ready(y2)
    assert y2.shape == x.shape and y2.dtype == x.dtype
    assert bool(jnp.array_equal(y2, x))

    # Explicitly exercise the tiled-copy fallback as well.
    y3 = jax.block_until_ready(_identity_copy_tiled(x))
    assert y3.shape == x.shape and y3.dtype == x.dtype
    assert bool(jnp.array_equal(y3, x))

    print("KERNEL_OK")
</pallas_src>

<mosaic_0001>
module attributes {stable_mosaic.version = 11 : i64} {
  func.func @_dma_copy_kernel(%arg0: memref<2x4x16x16xf32, #tpu.memory_space<any>>, %arg1: memref<2x4x16x16xf32, #tpu.memory_space<any>>, %arg2: memref<!tpu.dma_semaphore, #tpu.memory_space<semaphore_mem>>) attributes {dimension_semantics = [], scalar_prefetch = 0 : i64, scratch_operands = 1 : i64, tpu.core_type = #tpu.core_type<tc>} {
    tpu.enqueue_dma source(%arg0 : memref<2x4x16x16xf32, #tpu.memory_space<any>>) target(%arg1 : memref<2x4x16x16xf32, #tpu.memory_space<any>>) target_semaphore(%arg2 : memref<!tpu.dma_semaphore, #tpu.memory_space<semaphore_mem>>)
    tpu.wait_dma2 semaphore(%arg2 : memref<!tpu.dma_semaphore, #tpu.memory_space<semaphore_mem>>) src(%arg0 : memref<2x4x16x16xf32, #tpu.memory_space<any>>) dst(%arg1 : memref<2x4x16x16xf32, #tpu.memory_space<any>>)
    return
  }
}

module attributes {stable_mosaic.version = 11 : i64} {
  func.func @_copy_kernel(%arg0: i32, %arg1: memref<1x2048xf32, #tpu.memory_space<vmem>>, %arg2: memref<1x2048xf32, #tpu.memory_space<vmem>>) attributes {dimension_semantics = [#tpu.dimension_semantics<parallel>], iteration_bounds = array<i64: 1>, scalar_prefetch = 0 : i64, scratch_operands = 0 : i64, tpu.core_type = #tpu.core_type<tc>, window_params = [{transform_indices = @transform_0, window_bounds = array<i64: 1, 2048>}, {transform_indices = @transform_1, window_bounds = array<i64: 1, 2048>}]} {
    %c0 = arith.constant 0 : index
    %c0_0 = arith.constant 0 : index
    %0 = vector.load %arg1[%c0, %c0_0] : memref<1x2048xf32, #tpu.memory_space<vmem>>, vector<1x2048xf32>
    %c0_1 = arith.constant 0 : index
    %c0_2 = arith.constant 0 : index
    %1 = vector.load %arg2[%c0_1, %c0_2] : memref<1x2048xf32, #tpu.memory_space<vmem>>, vector<1x2048xf32>
    tpu.vector_store %arg2[%c0_1, %c0_2], %0 {strides = array<i32>} : memref<1x2048xf32, #tpu.memory_space<vmem>>, vector<1x2048xf32>,
    return
  }
  func.func @transform_0(%arg0: i32) -> (i32, i32) {
    %c0_i32 = arith.constant 0 : i32
    %c0_i32_0 = arith.constant 0 : i32
    return %arg0, %c0_i32 : i32, i32
  }
  func.func @transform_1(%arg0: i32) -> (i32, i32) {
    %c0_i32 = arith.constant 0 : i32
    %c0_i32_0 = arith.constant 0 : i32
    return %arg0, %c0_i32 : i32, i32
  }
}

</mosaic_0001>

<llo_original>
// kernel: tpu_custom_call.1
$region0: #{tpu_custom_call.1}
  #allocation0 [shape = 'u32[]', space=smem, size = 0x4, offset = 0x4, fixed_abs, tag = 'smem constant byte address 0x4 - core index']
  #allocation1 [shape = 'u32[144,128]{1,0:T(1,128)}', space=vmem, size = 0x12000, scoped, tag = 'internal scratch']
  #allocation2 [shape = 's32[1]{0}', space=sflag, size = 0x4, scoped, tag = 'scratch operand']
  #allocation3 [shape = 's32[]', space=sflag, size = 0x4, offset = 0, fixed_abs, tag = 'sflag constant byte address 0x0 - dummy sync flag']
  #allocation4 [shape = 'u32[0]{0}', space=smem, size = 0, offset = 0, fixed_abs, tag = 'smem constant byte address 0x0 - null']
  %s0 = inlined_call_operand.hbm [shape: f32[2,4,16,16], index: 0, kind: input, shape index: {}]
  %s1 = inlined_call_operand.hbm [shape: f32[2,4,16,16], index: 1, kind: output, shape index: {}]
  %s2 = sld [smem:[#allocation0]]
  $region2: #{tpu_custom_call.1} parent=0
    _
  %s4 = ssub.s32 1, %s2
  %s5 = scalar_select 0, %s4, %s2
  %s7 = sshll.u32 1, 14
  %s8 = sxor.u32 4294967295, %s7
  %s11 = sshll.u32 3, 24
  %s12 = sxor.u32 4294967295, %s11
  %s13 = sand.u32 0, %s12
  %s15 = sor.u32 %s13, 0
  %18 = dma.general %s0, 2048, %s1, [#allocation2], [#allocation3], [#allocation4], %s15, 0
  %s19 = smul.u32 2, 4
  %s20 = smul.u32 %s19, 16
  %s21 = smul.u32 %s20, 1
  %s22 = sshll.u32 %s21, 4
  %23 = dma.done [#allocation2], %s22
  %24 = vsyncmov [#allocation2]
  %s25 = vpop.sfrf %24
  %p26 = scmp.eq.s32.totalorder %s25, 0
  %p27 = pneg %p26
  %29 = shalt.err (%p27)

// kernel: tpu_custom_call.1
$region0: #{tpu_custom_call.1}
  #allocation0 [shape = 'u32[]', space=smem, size = 0x4, offset = 0x4, fixed_abs, tag = 'smem constant byte address 0x4 - core index']
  #allocation1 [shape = 'u32[144,128]{1,0:T(1,128)}', space=vmem, size = 0x12000, scoped, tag = 'internal scratch']
  %s0 = inlined_call_operand.hbm [shape: f32[1,2048], index: 0, kind: input, shape index: {}]
  %s1 = inlined_call_operand.hbm [shape: f32[1,2048], index: 1, kind: output, shape index: {}]
  %s2 = sld [smem:[#allocation0]]
  $region18: #{tpu_custom_call.1} parent=0
    _
  %s4 = ssub.s32 1, %s2
  %s5 = scalar_select 0, %s4, %s2
  $region1: #{tpu_custom_call.1} parent=0
    #allocation2 [shape = 'u8[8192]{0}', space=vmem, size = 0x2000, scoped, tag = 'input window, operand 0, single buffered']
    #allocation3 [shape = 's32[1]{0}', space=sflag, size = 0x4, scoped, tag = 'scoped memory for tpu_custom_call.1']
    #allocation4 [shape = 's32[1]{0}', space=sflag, size = 0x4, scoped, tag = 'scoped memory for tpu_custom_call.1']
    #allocation5 [shape = 'u8[8192]{0}', space=vmem, size = 0x2000, scoped, tag = 'output window, operand 0, single buffered']
    %6 = vsyncpa [#allocation3], 0
    %7 = vsyncpa [#allocation4], 0
    // Predicated region
    $region2: #{tpu_custom_call.1} parent=1 // pred_check
      _
    $region3: #{tpu_custom_call.1} parent=1 // pred_check_branch
      %9 = sbr.rel (0) target = $region5
    $region4: #{tpu_custom_call.1} parent=1 // pred_region
      %s11 = ssub.s32 256, 256
      %12 = vsyncadd [#allocation3], %s11
      %s14 = sshll.u32 [#allocation2], 4
      %s15 = int_to_ptr.vmem [resolvable:$true] %s14
      %17 = dma.hbm_to_vmem [thread:$0]  %s0, 256, %s15, [#allocation3]
    $region5: #{tpu_custom_call.1} parent=1 // pred_fallthru
      _
    // Predicated region
    $region6: #{tpu_custom_call.1} parent=1 // pred_check
      _
    $region7: #{tpu_custom_call.1} parent=1 // pred_check_branch
      %19 = sbr.rel (0) target = $region9
    $region8: #{tpu_custom_call.1} parent=1 // pred_region
      %20 = dma.done [#allocation3], 256
    $region9: #{tpu_custom_call.1} parent=1 // pred_fallthru
      _
    %v21 = vld [vmem:[#allocation2] sm:$0xff]
    %v22 = vld [vmem:[#allocation2 + $0x8] sm:$0xff]
    %23 = vst [vmem:[#allocation5] sm:$0xff] %v21
    %24 = vst [vmem:[#allocation5 + $0x8] sm:$0xff] %v22
    // Predicated region
    $region10: #{tpu_custom_call.1} parent=1 // pred_check
      _
    $region11: #{tpu_custom_call.1} parent=1 // pred_check_branch
      %26 = sbr.rel (0) target = $region13
    $region12: #{tpu_custom_call.1} parent=1 // pred_region
      %s28 = ssub.s32 256, 256
      %29 = vsyncadd [#allocation4], %s28
      %s31 = sshll.u32 [#allocation5], 4
      %s32 = int_to_ptr.vmem [resolvable:$true] %s31
      %34 = dma.vmem_to_hbm [thread:$0]  %s32, 256, %s1, [#allocation4]
    $region13: #{tpu_custom_call.1} parent=1 // pred_fallthru
      _
    // Predicated region
    $region14: #{tpu_custom_call.1} parent=1 // pred_check
      _
    $region15: #{tpu_custom_call.1} parent=1 // pred_check_branch
      %36 = sbr.rel (0) target = $region17
    $region16: #{tpu_custom_call.1} parent=1 // pred_region
      %37 = dma.done [#allocation4], 256
    $region17: #{tpu_custom_call.1} parent=1 // pred_fallthru
      _
    %38 = vsyncpa [#allocation3], 1
    %39 = vsyncpa [#allocation4], 1

</llo_original>
